<compile_context>
chip_gen: v5e
topology: v5e:2x2
jax: 0.10.0
libtpu: 0.0.40
codegen_flags: <defaults>
</compile_context>

<pallas_src>
import functools

import jax
import jax.numpy as jnp
from jax import lax
from jax.experimental import pallas as pl
from jax.experimental.pallas import tpu as pltpu


def _ada_iln_kernel(x_ref, params_ref, o_ref, *, eps, hw_true):
    # x_ref:      (1, C, HW_pad)  current batch element, lane-dense over HW
    # params_ref: (1, 3, C, 1)    rows: gamma*rho, gamma*(1-rho), beta
    # o_ref:      (1, C, HW_pad)
    x = x_ref[0]                                   # (C, HW_pad)
    C, HW_pad = x.shape
    xf = x.astype(jnp.float32)                     # no-op for f32 inputs
    # TODO(synk): for bf16 production inputs, chunk HW here (f32 accumulation
    # per chunk) to avoid materializing a full-tile f32 upcast.

    # ---- per-channel (instance) partials: sum + centered sum-of-squares ----
    in_sum = jnp.sum(xf, axis=1, keepdims=True)                    # (C, 1)
    in_mean = in_sum * (1.0 / hw_true)
    d = xf - in_mean
    if hw_true != HW_pad:
        # Mask the zero-padded tail lanes out of the centered sumsq
        # (trace-time branch: no cost when HW is already a multiple of 128).
        lane = lax.broadcasted_iota(jnp.int32, (1, HW_pad), 1)
        d = jnp.where(lane < hw_true, d, 0.0)
    in_ssq = jnp.sum(d * d, axis=1, keepdims=True)                 # (C, 1)
    in_var = in_ssq * (1.0 / (hw_true - 1))        # unbiased, matches torch.var

    # ---- layer-norm stats from the per-channel partials (exact combine) ----
    n_ln = C * hw_true
    ln_mean = jnp.sum(in_sum) * (1.0 / n_ln)                       # scalar
    dm = in_mean - ln_mean
    ln_ssq = jnp.sum(in_ssq) + hw_true * jnp.sum(dm * dm)
    ln_var = ln_ssq * (1.0 / (n_ln - 1))

    inv_in = lax.rsqrt(in_var + eps)                               # (C, 1)
    inv_ln = lax.rsqrt(ln_var + eps)                               # scalar

    # ---- fold mix + affine into one per-channel scale / offset ----
    p = params_ref[0].astype(jnp.float32)                          # (3, C, 1)
    grho = p[0]       # gamma * rho
    g1mr = p[1]       # gamma * (1 - rho)
    beta = p[2]       # beta

    scale = grho * inv_in + g1mr * inv_ln                          # (C, 1)
    offset = beta - (grho * (in_mean * inv_in) + g1mr * (ln_mean * inv_ln))

    # single per-element FMA
    o_ref[0] = (xf * scale + offset).astype(o_ref.dtype)


def ada_iln(x, rho, gamma, beta, eps=1e-5):
    """x: (B, C, H, W); rho: (1, C, 1, 1); gamma, beta: (B, C)."""
    B, C, H, W = x.shape
    HW = H * W
    HW_pad = ((HW + 127) // 128) * 128            # keep stores lane-dense
    xr = x.reshape(B, C, HW)
    if HW_pad != HW:
        xr = jnp.pad(xr, ((0, 0), (0, 0), (0, HW_pad - HW)))

    # Pre-combine rho with gamma (tiny (B, C) math, done once in the wrapper)
    # and pack all per-channel params into one input -> one small DMA/step.
    rho_c = rho.reshape(1, C).astype(jnp.float32)
    gamma32 = gamma.astype(jnp.float32)
    beta32 = beta.astype(jnp.float32)
    params = jnp.stack(
        [gamma32 * rho_c, gamma32 * (1.0 - rho_c), beta32], axis=1
    ).reshape(B, 3, C, 1)

    kernel = functools.partial(_ada_iln_kernel, eps=float(eps), hw_true=HW)

    # Explicit VMEM budget: 2x double-buffered input + 2x output blocks plus
    # headroom for the f32 stats temporaries and the packed params.
    block_bytes = C * HW_pad * x.dtype.itemsize
    vmem_need = 4 * block_bytes + 2 * C * HW_pad * 4 + (2 << 20)
    if vmem_need > (64 << 20):
        # TODO(synk): for blocks this large (v7x has only 64 MiB VMEM), add an
        # HW grid axis with a two-phase (stats-accumulate, then normalize)
        # structure instead of one-block-per-batch.
        raise ValueError("adaILN block too large for one-block-per-batch tiling")
    vmem_limit = int(min(max(vmem_need, 16 << 20), 64 << 20))

    out = pl.pallas_call(
        kernel,
        out_shape=jax.ShapeDtypeStruct((B, C, HW_pad), x.dtype),
        grid_spec=pltpu.PrefetchScalarGridSpec(
            num_scalar_prefetch=0,
            grid=(B,),
            in_specs=[
                pl.BlockSpec((1, C, HW_pad), lambda i: (i, 0, 0)),    # x
                pl.BlockSpec((1, 3, C, 1), lambda i: (i, 0, 0, 0)),   # packed params
            ],
            out_specs=pl.BlockSpec((1, C, HW_pad), lambda i: (i, 0, 0)),
        ),
        compiler_params=pltpu.CompilerParams(
            dimension_semantics=("parallel",),
            vmem_limit_bytes=vmem_limit,
        ),
        # TODO(synk): when B == 1 on v7x, split C across a second "parallel"
        # grid axis (LN stats via a tiny pre-pass) to use the second TensorCore.
    )(xr, params)

    if HW_pad != HW:
        out = out[:, :, :HW]
    return out.reshape(B, C, H, W)


def ada_iln_reference(x, rho, gamma, beta, eps=1e-5):
    """Pure-JAX reference mirroring the PyTorch forward (unbiased var)."""
    x32 = x.astype(jnp.float32)
    in_mean = jnp.mean(x32, axis=(2, 3), keepdims=True)
    in_var = jnp.var(x32, axis=(2, 3), keepdims=True, ddof=1)
    out_in = (x32 - in_mean) / jnp.sqrt(in_var + eps)
    ln_mean = jnp.mean(x32, axis=(1, 2, 3), keepdims=True)
    ln_var = jnp.var(x32, axis=(1, 2, 3), keepdims=True, ddof=1)
    out_ln = (x32 - ln_mean) / jnp.sqrt(ln_var + eps)
    out = rho * out_in + (1.0 - rho) * out_ln
    out = out * gamma[:, :, None, None] + beta[:, :, None, None]
    return out.astype(x.dtype)


if __name__ == "__main__":
    B, C, H, W = 2, 4, 16, 16
    key = jax.random.PRNGKey(0)
    kx, kg, kb = jax.random.split(key, 3)

    x = jax.random.normal(kx, (B, C, H, W), dtype=jnp.float32)
    gamma = jax.random.normal(kg, (B, C), dtype=jnp.float32)
    beta = jax.random.normal(kb, (B, C), dtype=jnp.float32)
    # Parameter from __init__: rho of shape (1, C, 1, 1) filled with 0.9.
    rho = jnp.full((1, C, 1, 1), 0.9, dtype=jnp.float32)

    out = jax.block_until_ready(ada_iln(x, rho, gamma, beta))
    ref = ada_iln_reference(x, rho, gamma, beta)
    assert out.shape == (B, C, H, W)
    assert jnp.allclose(out, ref, atol=1e-4, rtol=1e-4), "mismatch vs reference"

    # Non-multiple-of-128 spatial size exercises the padded / masked-stats path.
    x2 = jax.random.normal(kx, (B, C, 10, 10), dtype=jnp.float32)
    out2 = jax.block_until_ready(ada_iln(x2, rho, gamma, beta))
    ref2 = ada_iln_reference(x2, rho, gamma, beta)
    assert jnp.allclose(out2, ref2, atol=1e-4, rtol=1e-4), "mismatch (padded path)"

    print("KERNEL_OK")
</pallas_src>

<mosaic_0001>
module attributes {stable_mosaic.version = 11 : i64} {
  func.func @_ada_iln_kernel(%arg0: i32, %arg1: memref<1x4x256xf32, #tpu.memory_space<vmem>>, %arg2: memref<1x3x4x1xf32, #tpu.memory_space<vmem>>, %arg3: memref<1x4x256xf32, #tpu.memory_space<vmem>>) attributes {dimension_semantics = [#tpu.dimension_semantics<parallel>], iteration_bounds = array<i64: 2>, scalar_prefetch = 0 : i64, scratch_operands = 0 : i64, tpu.core_type = #tpu.core_type<tc>, window_params = [{transform_indices = @transform_0, window_bounds = array<i64: 1, 4, 256>}, {transform_indices = @transform_1, window_bounds = array<i64: 1, 3, 4, 1>}, {transform_indices = @transform_2, window_bounds = array<i64: 1, 4, 256>}]} {
    %c0 = arith.constant 0 : index
    %c0_0 = arith.constant 0 : index
    %c0_1 = arith.constant 0 : index
    %0 = vector.load %arg1[%c0, %c0_0, %c0_1] : memref<1x4x256xf32, #tpu.memory_space<vmem>>, vector<1x4x256xf32>
    %1 = vector.shape_cast %0 : vector<1x4x256xf32> to vector<4x256xf32>
    %cst = arith.constant dense<0.000000e+00> : vector<4xf32>
    %2 = vector.multi_reduction <add>, %1, %cst [1] : vector<4x256xf32> to vector<4xf32>
    %3 = vector.shape_cast %2 : vector<4xf32> to vector<4x1xf32>
    %cst_2 = arith.constant 3.906250e-03 : f32
    %4 = vector.broadcast %cst_2 : f32 to vector<4x1xf32>
    %5 = arith.mulf %3, %4 : vector<4x1xf32>
    %6 = vector.broadcast %5 : vector<4x1xf32> to vector<4x256xf32>
    %7 = arith.subf %1, %6 : vector<4x256xf32>
    %8 = arith.mulf %7, %7 : vector<4x256xf32>
    %cst_3 = arith.constant dense<0.000000e+00> : vector<4xf32>
    %9 = vector.multi_reduction <add>, %8, %cst_3 [1] : vector<4x256xf32> to vector<4xf32>
    %10 = vector.shape_cast %9 : vector<4xf32> to vector<4x1xf32>
    %cst_4 = arith.constant 0.00392156886 : f32
    %11 = vector.broadcast %cst_4 : f32 to vector<4x1xf32>
    %12 = arith.mulf %10, %11 : vector<4x1xf32>
    %13 = vector.shape_cast %3 : vector<4x1xf32> to vector<1x4x1xf32>
    %cst_5 = arith.constant dense<0.000000e+00> : vector<1xf32>
    %14 = vector.multi_reduction <add>, %13, %cst_5 [1, 2] : vector<1x4x1xf32> to vector<1xf32>
    %15 = vector.shape_cast %14 : vector<1xf32> to vector<1x1x1xf32>
    %16 = vector.extract %15[0, 0, 0] : f32 from vector<1x1x1xf32>
    %cst_6 = arith.constant 9.765625E-4 : f32
    %17 = arith.mulf %16, %cst_6 : f32
    %18 = vector.broadcast %17 : f32 to vector<4x1xf32>
    %19 = arith.subf %5, %18 : vector<4x1xf32>
    %20 = vector.shape_cast %10 : vector<4x1xf32> to vector<1x4x1xf32>
    %cst_7 = arith.constant dense<0.000000e+00> : vector<1xf32>
    %21 = vector.multi_reduction <add>, %20, %cst_7 [1, 2] : vector<1x4x1xf32> to vector<1xf32>
    %22 = vector.shape_cast %21 : vector<1xf32> to vector<1x1x1xf32>
    %23 = vector.extract %22[0, 0, 0] : f32 from vector<1x1x1xf32>
    %24 = arith.mulf %19, %19 : vector<4x1xf32>
    %25 = vector.shape_cast %24 : vector<4x1xf32> to vector<1x4x1xf32>
    %cst_8 = arith.constant dense<0.000000e+00> : vector<1xf32>
    %26 = vector.multi_reduction <add>, %25, %cst_8 [1, 2] : vector<1x4x1xf32> to vector<1xf32>
    %27 = vector.shape_cast %26 : vector<1xf32> to vector<1x1x1xf32>
    %28 = vector.extract %27[0, 0, 0] : f32 from vector<1x1x1xf32>
    %cst_9 = arith.constant 2.560000e+02 : f32
    %29 = arith.mulf %cst_9, %28 : f32
    %30 = arith.addf %23, %29 : f32
    %cst_10 = arith.constant 9.77517105E-4 : f32
    %31 = arith.mulf %30, %cst_10 : f32
    %cst_11 = arith.constant 9.99999974E-6 : f32
    %32 = vector.broadcast %cst_11 : f32 to vector<4x1xf32>
    %33 = arith.addf %12, %32 : vector<4x1xf32>
    %34 = math.rsqrt %33 : vector<4x1xf32>
    %cst_12 = arith.constant 9.99999974E-6 : f32
    %35 = arith.addf %31, %cst_12 : f32
    %36 = math.rsqrt %35 : f32
    %c0_13 = arith.constant 0 : index
    %c0_14 = arith.constant 0 : index
    %c0_15 = arith.constant 0 : index
    %c0_16 = arith.constant 0 : index
    %37 = vector.load %arg2[%c0_13, %c0_14, %c0_15, %c0_16] : memref<1x3x4x1xf32, #tpu.memory_space<vmem>>, vector<1x3x4x1xf32>
    %38 = vector.shape_cast %37 : vector<1x3x4x1xf32> to vector<3x4x1xf32>
    %39 = vector.extract_strided_slice %38 {offsets = [0, 0, 0], sizes = [1, 4, 1], strides = [1, 1, 1]} : vector<3x4x1xf32> to vector<1x4x1xf32>
    %40 = vector.shape_cast %39 : vector<1x4x1xf32> to vector<4x1xf32>
    %41 = vector.extract_strided_slice %38 {offsets = [1, 0, 0], sizes = [1, 4, 1], strides = [1, 1, 1]} : vector<3x4x1xf32> to vector<1x4x1xf32>
    %42 = vector.shape_cast %41 : vector<1x4x1xf32> to vector<4x1xf32>
    %43 = vector.extract_strided_slice %38 {offsets = [2, 0, 0], sizes = [1, 4, 1], strides = [1, 1, 1]} : vector<3x4x1xf32> to vector<1x4x1xf32>
    %44 = vector.shape_cast %43 : vector<1x4x1xf32> to vector<4x1xf32>
    %45 = arith.mulf %40, %34 : vector<4x1xf32>
    %46 = vector.broadcast %36 : f32 to vector<4x1xf32>
    %47 = arith.mulf %42, %46 : vector<4x1xf32>
    %48 = arith.addf %45, %47 : vector<4x1xf32>
    %49 = arith.mulf %5, %34 : vector<4x1xf32>
    %50 = arith.mulf %40, %49 : vector<4x1xf32>
    %51 = arith.mulf %17, %36 : f32
    %52 = vector.broadcast %51 : f32 to vector<4x1xf32>
    %53 = arith.mulf %42, %52 : vector<4x1xf32>
    %54 = arith.addf %50, %53 : vector<4x1xf32>
    %55 = arith.subf %44, %54 : vector<4x1xf32>
    %56 = vector.broadcast %48 : vector<4x1xf32> to vector<4x256xf32>
    %57 = arith.mulf %1, %56 : vector<4x256xf32>
    %58 = vector.broadcast %55 : vector<4x1xf32> to vector<4x256xf32>
    %59 = arith.addf %57, %58 : vector<4x256xf32>
    %c0_17 = arith.constant 0 : index
    %c0_18 = arith.constant 0 : index
    %c0_19 = arith.constant 0 : index
    %60 = vector.load %arg3[%c0_17, %c0_18, %c0_19] : memref<1x4x256xf32, #tpu.memory_space<vmem>>, vector<1x4x256xf32>
    %61 = vector.shape_cast %60 : vector<1x4x256xf32> to vector<4x256xf32>
    %62 = vector.shape_cast %59 : vector<4x256xf32> to vector<1x4x256xf32>
    tpu.vector_store %arg3[%c0_17, %c0_18, %c0_19], %62 {strides = array<i32>} : memref<1x4x256xf32, #tpu.memory_space<vmem>>, vector<1x4x256xf32>,
    return
  }
  func.func @transform_0(%arg0: i32) -> (i32, i32, i32) {
    %c0_i32 = arith.constant 0 : i32
    %c0_i32_0 = arith.constant 0 : i32
    %c0_i32_1 = arith.constant 0 : i32
    return %arg0, %c0_i32, %c0_i32_0 : i32, i32, i32
  }
  func.func @transform_1(%arg0: i32) -> (i32, i32, i32, i32) {
    %c0_i32 = arith.constant 0 : i32
    %c0_i32_0 = arith.constant 0 : i32
    %c0_i32_1 = arith.constant 0 : i32
    %c0_i32_2 = arith.constant 0 : i32
    return %arg0, %c0_i32, %c0_i32_0, %c0_i32_1 : i32, i32, i32, i32
  }
  func.func @transform_2(%arg0: i32) -> (i32, i32, i32) {
    %c0_i32 = arith.constant 0 : i32
    %c0_i32_0 = arith.constant 0 : i32
    %c0_i32_1 = arith.constant 0 : i32
    return %arg0, %c0_i32, %c0_i32_0 : i32, i32, i32
  }
}

</mosaic_0001>

<llo_original>
// kernel: tpu_custom_call.1
$region0: #{tpu_custom_call.1}
  #allocation0 [shape = 'u32[]', space=smem, size = 0x4, offset = 0x4, fixed_abs, tag = 'smem constant byte address 0x4 - core index']
  #allocation1 [shape = 'u32[72,128]{1,0:T(1,128)}', space=vmem, size = 0x9000, scoped, tag = 'internal scratch']
  %s0 = inlined_call_operand.vmem [shape: f32[2,4,256], index: 0, kind: input, shape index: {}]
  %s1 = inlined_call_operand.vmem [shape: f32[2,3,4,1], index: 1, kind: input, shape index: {}]
  %s2 = inlined_call_operand.hbm [shape: f32[2,4,256], index: 2, kind: output, shape index: {}]
  %s3 = sld [smem:[#allocation0]]
  $region41: #{tpu_custom_call.1} parent=0
    _
  %s5 = ssub.s32 1, %s3
  %s6 = scalar_select 0, %s5, %s3
  $region1: #{tpu_custom_call.1} parent=0
    #allocation2 [shape = 'u8[8192]{0}', space=vmem, size = 0x2000, scoped, tag = 'output window, operand 0']
    #allocation3 [shape = 's32[2]{0}', space=sflag, size = 0x8, scoped, tag = 'scoped memory for tpu_custom_call.1']
    %7 = vsyncpa [#allocation3], 0
    %s8 = scalar_lea.sflag [#allocation3], 1
    %9 = vsyncpa %s8, 0
    loop: start=0, step=1, limit=4
    $region2: #{tpu_custom_call.1} parent=1 // loop_pre_header
      _
    $region3: #{tpu_custom_call.1} parent=1 // loop_header
      %s11 = sphi 0, %s15
      %p12 = scmp.ge.s32.totalorder %s11, 4
      %s21 = sphi 0, %s23
      %s24 = sphi 0, %s21
      %s25 = sphi 0, %s24
      %s41 = sphi 0, %s25
      %s47 = sphi 0, %s49
      %s50 = sphi 0, %s47
      %s51 = sphi 0, %s50
      %s67 = sphi 0, %s51
      %s73 = sphi 0, %s75
      %s76 = sphi 0, %s73
      %s77 = sphi 0, %s76
      %s93 = sphi 0, %s77
    $region4: #{tpu_custom_call.1} parent=1 // loop_header_branch
      %14 = sbr.rel (%p12) target = $region8
    $region5: #{tpu_custom_call.1} parent=1 // loop_body
      %s16 = ssub.s32 %s11, 1
      %s17 = ssub.s32 %s11, 2
      %s18 = sadd.s32 %s11, 1
      %s19 = ssub.s32 %s11, %s18
      %p20 = scmp.eq.s32.totalorder %s19, 0
      %s22 = sadd.s32 %s21, 1
      %s23 = scalar_select %p20, %s21, %s22
      %p26 = pneg %p20
      %p27 = scmp.eq.s32.totalorder %s11, 1
      %p28 = por %p26, %p27
      %p29 = scmp.ne.s32.totalorder %s21, %s24
      %p30 = scmp.eq.s32.totalorder %s11, 0
      %p31 = por %p29, %p30
      %p32 = scmp.ne.s32.totalorder %s21, %s24
      %p33 = scmp.eq.s32.totalorder %s16, 1
      %p34 = por %p32, %p33
      %p35 = scmp.ne.s32.totalorder %s24, %s25
      %p36 = scmp.eq.s32.totalorder %s16, 0
      %p37 = por %p35, %p36
      %p38 = scmp.ne.s32.totalorder %s24, %s25
      %p39 = scmp.eq.s32.totalorder %s17, 1
      %p40 = por %p38, %p39
      %p42 = scmp.ne.s32.totalorder %s25, %s41
      %p43 = scmp.eq.s32.totalorder %s17, 0
      %p44 = por %p42, %p43
      %s45 = ssub.s32 %s11, %s18
      %p46 = scmp.eq.s32.totalorder %s45, 0
      %s48 = sadd.s32 %s47, 1
      %s49 = scalar_select %p46, %s47, %s48
      %p52 = pneg %p46
      %p53 = scmp.eq.s32.totalorder %s11, 1
      %p54 = por %p52, %p53
      %p55 = scmp.ne.s32.totalorder %s47, %s50
      %p56 = scmp.eq.s32.totalorder %s11, 0
      %p57 = por %p55, %p56
      %p58 = scmp.ne.s32.totalorder %s47, %s50
      %p59 = scmp.eq.s32.totalorder %s16, 1
      %p60 = por %p58, %p59
      %p61 = scmp.ne.s32.totalorder %s50, %s51
      %p62 = scmp.eq.s32.totalorder %s16, 0
      %p63 = por %p61, %p62
      %p64 = scmp.ne.s32.totalorder %s50, %s51
      %p65 = scmp.eq.s32.totalorder %s17, 1
      %p66 = por %p64, %p65
      %p68 = scmp.ne.s32.totalorder %s51, %s67
      %p69 = scmp.eq.s32.totalorder %s17, 0
      %p70 = por %p68, %p69
      %s71 = ssub.s32 %s11, %s18
      %p72 = scmp.eq.s32.totalorder %s71, 0
      %s74 = sadd.s32 %s73, 1
      %s75 = scalar_select %p72, %s73, %s74
      %p78 = pneg %p72
      %p79 = scmp.eq.s32.totalorder %s11, 1
      %p80 = por %p78, %p79
      %p81 = scmp.ne.s32.totalorder %s73, %s76
      %p82 = scmp.eq.s32.totalorder %s11, 0
      %p83 = por %p81, %p82
      %p84 = scmp.ne.s32.totalorder %s73, %s76
      %p85 = scmp.eq.s32.totalorder %s16, 1
      %p86 = por %p84, %p85
      %p87 = scmp.ne.s32.totalorder %s76, %s77
      %p88 = scmp.eq.s32.totalorder %s16, 0
      %p89 = por %p87, %p88
      %p90 = scmp.ne.s32.totalorder %s76, %s77
      %p91 = scmp.eq.s32.totalorder %s17, 1
      %p92 = por %p90, %p91
      %p94 = scmp.ne.s32.totalorder %s77, %s93
      %p95 = scmp.eq.s32.totalorder %s17, 0
      %p96 = por %p94, %p95
      %p97 = scmp.le.s32.totalorder 1, %s11
      %p98 = scmp.lt.s32.totalorder %s11, 3
      %p99 = pnand %p97, %p98
      %p100 = pneg %p99
      // Predicated region
      $region9: #{tpu_custom_call.1} parent=5 // pred_check
        _
      $region10: #{tpu_custom_call.1} parent=5 // pred_check_branch
        %102 = sbr.rel (%p99) target = $region12
      $region11: #{tpu_custom_call.1} parent=5 // pred_region
        %s103 = ssub.s32 %s11, 1
      $region12: #{tpu_custom_call.1} parent=5 // pred_fallthru
        _
      %p104 = scmp.lt.s32.totalorder %s11, 2
      // Predicated region
      $region13: #{tpu_custom_call.1} parent=5 // pred_check
        %p105 = pneg %p104
      $region14: #{tpu_custom_call.1} parent=5 // pred_check_branch
        %107 = sbr.rel (%p105) target = $region16
      $region15: #{tpu_custom_call.1} parent=5 // pred_region
        // Predicated region
        $region17: #{tpu_custom_call.1} parent=15 // pred_check
          %p108 = pneg %p31
        $region18: #{tpu_custom_call.1} parent=15 // pred_check_branch
          %110 = sbr.rel (%p108) target = $region20
        $region19: #{tpu_custom_call.1} parent=15 // pred_region
          %p111 = scmp.lt.s32.totalorder %s11, 1
          %s112 = scalar_select %p111, %s11, 1
          %s113 = smul.addr %s112, 2
          %s114 = smul.addr %s113, 4
          %s115 = scalar_lea.vmem %s0, %s114
        $region20: #{tpu_custom_call.1} parent=15 // pred_fallthru
          _
        // Predicated region
        $region21: #{tpu_custom_call.1} parent=15 // pred_check
          %p116 = pneg %p57
        $region22: #{tpu_custom_call.1} parent=15 // pred_check_branch
          %118 = sbr.rel (%p116) target = $region24
        $region23: #{tpu_custom_call.1} parent=15 // pred_region
          %p119 = scmp.lt.s32.totalorder %s11, 1
          %s120 = scalar_select %p119, %s11, 1
          %s121 = smul.addr %s120, 3
          %s122 = smul.addr %s121, 4
          %s123 = scalar_lea.vmem %s1, %s122
        $region24: #{tpu_custom_call.1} parent=15 // pred_fallthru
          _
      $region16: #{tpu_custom_call.1} parent=5 // pred_fallthru
        _
      %p124 = scmp.le.s32.totalorder 1, %s11
      %p125 = scmp.lt.s32.totalorder %s11, 3
      %p126 = pnand %p124, %p125
      %p127 = pneg %p126
      // Predicated region
      $region25: #{tpu_custom_call.1} parent=5 // pred_check
        _
      $region26: #{tpu_custom_call.1} parent=5 // pred_check_branch
        %129 = sbr.rel (%p126) target = $region28
      $region27: #{tpu_custom_call.1} parent=5 // pred_region
        %s130 = ssub.s32 %s11, 1
        %p131 = scmp.lt.s32.totalorder %s16, 1
        %s132 = scalar_select %p131, %s16, 1
        %s133 = smul.addr %s132, 2
        %s134 = smul.addr %s133, 4
        %s135 = scalar_lea.vmem %s0, %s134
        %p136 = pneg %p37
        %p137 = pneg %p34
        %p138 = scmp.lt.s32.totalorder %s16, 1
        %s139 = scalar_select %p138, %s16, 1
        %s140 = smul.addr %s139, 3
        %s141 = smul.addr %s140, 4
        %s142 = scalar_lea.vmem %s1, %s141
        %p143 = pneg %p63
        %p144 = pneg %p60
        %p145 = pneg %p89
        %p146 = pneg %p86
        %s147 = sand.u32 %s76, 1
        %s148 = scalar_lea.sflag [#allocation3], %s147
        %s149 = sand.u32 %s76, 1
        %s150 = smul.addr %s149, 8
        %s151 = scalar_lea.vmem [#allocation2], %s150
        %p152 = scmp.lt.s32.totalorder %s16, 1
        %s153 = scalar_select %p152, %s16, 1
        %s154 = smul.addr %s153, 2
        %s155 = smul.addr %s154, 4
        %s156 = scalar_lea.vmem %s0, %s155
        %p157 = scmp.lt.s32.totalorder %s16, 1
        %s158 = scalar_select %p157, %s16, 1
        %s159 = smul.addr %s158, 3
        %s160 = smul.addr %s159, 4
        %s161 = scalar_lea.vmem %s1, %s160
        %v162 = vld [vmem:[%s156] sm:$0xff]
        %164 = vst [vmem:[#allocation1] ss:$2 sm:$0xff] %v162
        %v165 = vld.sshfl [vmem:[#allocation1] sm:$0xff pattern:$0x75316420]
        %v166 = vld.sshfl [vmem:[#allocation1 + $0x8] sm:$0xff pattern:$0x75316420]
        %vm169 = vcmask 1043456
        %v170 = vsel %vm169, %v165, 0.0
        %v171 = vsel %vm169, %v166, 0.0
        %v172 = vadd.f32 %v170, %v171
        %173 = vadd.xlane.f32.xlu0 %v172
        %v174 = vpop.xlane.xlu0 %173
        %v175 = vmul.f32 %v174, 0.00390625
        %v178 = vunpack.c.l.s4 839922192
        %v179 = vunpack.c.0.s8 %v178
        %v180 = vperm.slane %v175, %v179
        %v182 = vsub.f32 %v162, %v180
        %v183 = vmul.f32 %v182, %v182
        %185 = vst [vmem:[#allocation1] ss:$2 sm:$0xff] %v183
        %v186 = vld.sshfl [vmem:[#allocation1] sm:$0xff pattern:$0x75316420]
        %v187 = vld.sshfl [vmem:[#allocation1 + $0x8] sm:$0xff pattern:$0x75316420]
        %v190 = vsel %vm169, %v186, 0.0
        %v191 = vsel %vm169, %v187, 0.0
        %v192 = vadd.f32 %v190, %v191
        %193 = vadd.xlane.f32.xlu0 %v192
        %v194 = vpop.xlane.xlu0 %193
        %v195 = vmul.f32 %v194, 0.003921569
        %vm196 = vcmask 3072
        %v197 = vsel %vm196, %v174, 0.0
        %198 = vadd.xlane.f32.xlu0 %v197
        %v199 = vpop.xlane.xlu0 %198
        %v200 = vrot.slane %v199, 4
        %v201 = vadd.f32 %v199, %v200
        %v202 = vrot.slane %v201, 2
        %v203 = vadd.f32 %v201, %v202
        %v204 = vrot.slane %v203, 1
        %v205 = vadd.f32 %v203, %v204
        %s206 = vtos %v205
        %s207 = smul.f32 %s206, 0.0009765625
        %v208 = vstv %s207
        %v209 = vsub.f32 %v175, %v208
        %v210 = vsel %vm196, %v194, 0.0
        %211 = vadd.xlane.f32.xlu0 %v210
        %v212 = vpop.xlane.xlu0 %211
        %v213 = vrot.slane %v212, 4
        %v214 = vadd.f32 %v212, %v213
        %v215 = vrot.slane %v214, 2
        %v216 = vadd.f32 %v214, %v215
        %v217 = vrot.slane %v216, 1
        %v218 = vadd.f32 %v216, %v217
        %s219 = vtos %v218
        %v220 = vmul.f32 %v209, %v209
        %v221 = vsel %vm196, %v220, 0.0
        %222 = vadd.xlane.f32.xlu0 %v221
        %v223 = vpop.xlane.xlu0 %222
        %v224 = vrot.slane %v223, 4
        %v225 = vadd.f32 %v223, %v224
        %v226 = vrot.slane %v225, 2
        %v227 = vadd.f32 %v225, %v226
        %v228 = vrot.slane %v227, 1
        %v229 = vadd.f32 %v227, %v228
        %s230 = vtos %v229
        %s231 = smul.f32 %s230, 256.0
        %s232 = sadd.f32 %s219, %s231
        %s233 = smul.f32 %s232, 0.0009775171
        %v234 = vadd.f32 %v195, 1e-05
        %v235 = vrsqrt.pop %v234
        %v236 = vmul.f32 %v235, %v234
        %v237 = vmul.f32 %v236, %v235
        %v238 = vmul.f32 0.5, %v237
        %v239 = vsub.f32 1.5, %v238
        %v240 = vmul.f32 %v235, %v239
        %vm241 = vweird.f32 %v234
        %vm242 = vweird.f32 %v235
        %vm243 = vmor %vm241, %vm242
        %v244 = vsel %vm243, %v235, %v240
        %s245 = sadd.f32 %s233, 1e-05
        %v246 = vstv %s245
        %v247 = vrsqrt.pop %v246
        %v248 = vmul.f32 %v247, %v246
        %v249 = vmul.f32 %v248, %v247
        %v250 = vmul.f32 0.5, %v249
        %v251 = vsub.f32 1.5, %v250
        %v252 = vmul.f32 %v247, %v251
        %vm253 = vweird.f32 %v246
        %vm254 = vweird.f32 %v247
        %vm255 = vmor %vm253, %vm254
        %v256 = vsel %vm255, %v247, %v252
        %s257 = vtos %v256
        %v258 = vld [vmem:[%s161] sm:$0xf]
        %v259 = vld [vmem:[%s161 + $0x4] sm:$0xf]
        %v260 = vld [vmem:[%s161 + $0x8] sm:$0xf]
        %v261 = vmul.f32 %v258, %v244
        %v262 = vstv %s257
        %v263 = vmul.f32 %v259, %v262
        %v264 = vadd.f32 %v261, %v263
        %v265 = vmul.f32 %v175, %v244
        %v266 = vmul.f32 %v258, %v265
        %s267 = smul.f32 %s207, %s257
        %v268 = vstv %s267
        %v269 = vmul.f32 %v259, %v268
        %v270 = vadd.f32 %v266, %v269
        %v271 = vsub.f32 %v260, %v270
        %273 = vset.pattern.permute.xlu0 0
        %274 = vperm.xlu0 %273, %v264
        %v275 = vpop.permute.xlu0 %274
        %v277 = vunpack.c.l.s4 839922192
        %v278 = vunpack.c.0.s8 %v277
        %v279 = vperm.slane %v275, %v278
        %v281 = vmul.f32 %v162, %v279
        %283 = vset.pattern.permute.xlu0 0
        %284 = vperm.xlu0 %283, %v271
        %v285 = vpop.permute.xlu0 %284
        %v287 = vunpack.c.l.s4 839922192
        %v288 = vunpack.c.0.s8 %v287
        %v289 = vperm.slane %v285, %v288
        %v291 = vadd.f32 %v281, %v289
        %292 = vst [vmem:[%s151] sm:$0xff] %v291
        %s293 = sand.u32 %s76, 1
        %s294 = scalar_lea.sflag [#allocation3], %s293
        %s295 = sand.u32 %s76, 1
        %s296 = smul.addr %s295, 8
        %s297 = scalar_lea.vmem [#allocation2], %s296
        // Predicated region
        $region29: #{tpu_custom_call.1} parent=27 // pred_check
          %p298 = pneg %p86
        $region30: #{tpu_custom_call.1} parent=27 // pred_check_branch
          %300 = sbr.rel (%p298) target = $region32
        $region31: #{tpu_custom_call.1} parent=27 // pred_region
          %302 = vsyncadd %s294, 0
          %s303 = smul.addr %s16, 2
          %s304 = smul.addr %s303, 4
          %s305 = scalar_lea.hbm %s2, %s304
          %s307 = sshll.u32 %s297, 4
          %s308 = int_to_ptr.vmem [resolvable:$true] %s307
          %s309 = sshll.u32 %s305, 4
          %s310 = int_to_ptr.hbm [resolvable:$true] %s309
          %312 = dma.vmem_to_hbm [thread:$0]  %s308, 128, %s310, %s294
        $region32: #{tpu_custom_call.1} parent=27 // pred_fallthru
          _
      $region28: #{tpu_custom_call.1} parent=5 // pred_fallthru
        _
      %p313 = scmp.le.s32.totalorder 2, %s11
      // Predicated region
      $region33: #{tpu_custom_call.1} parent=5 // pred_check
        %p314 = pneg %p313
      $region34: #{tpu_custom_call.1} parent=5 // pred_check_branch
        %316 = sbr.rel (%p314) target = $region36
      $region35: #{tpu_custom_call.1} parent=5 // pred_region
        %s317 = ssub.s32 %s11, 2
        // Predicated region
        $region37: #{tpu_custom_call.1} parent=35 // pred_check
          %p318 = pneg %p92
        $region38: #{tpu_custom_call.1} parent=35 // pred_check_branch
          %320 = sbr.rel (%p318) target = $region40
        $region39: #{tpu_custom_call.1} parent=35 // pred_region
          %s321 = sand.u32 %s77, 1
          %s322 = scalar_lea.sflag [#allocation3], %s321
          %s323 = sand.u32 %s77, 1
          %s324 = smul.addr %s323, 8
          %s325 = scalar_lea.vmem [#allocation2], %s324
          %327 = dma.done %s322, 128
        $region40: #{tpu_custom_call.1} parent=35 // pred_fallthru
          _
      $region36: #{tpu_custom_call.1} parent=5 // pred_fallthru
        _
    $region6: #{tpu_custom_call.1} parent=1 // loop_footer
      %s15 = sadd.s32 1, %s11
    $region7: #{tpu_custom_call.1} parent=1 // loop_footer_branch
      %10 = sbr.rel target = $region3
    $region8: #{tpu_custom_call.1} parent=1 // loop_exit
      _
    %328 = vsyncpa [#allocation3], 1
    %s329 = scalar_lea.sflag [#allocation3], 1
    %330 = vsyncpa %s329, 1

</llo_original>
